<compile_context>
chip_gen: v7x
topology: tpu7x:2x2x1
jax: 0.10.0
libtpu: 0.0.40
codegen_flags: <defaults>
</compile_context>

<pallas_src>
import jax
import jax.numpy as jnp
from jax import lax
from jax.experimental import pallas as pl
from jax.experimental.pallas import tpu as pltpu

EPS = 1e-8  # F.cosine_similarity default eps


def variance_map_kernel(x_ref, o_ref):
    # x_ref: (N, C, T) VMEM tile (batch dim squeezed out).  o_ref: (1, 1, T).
    n, c, t = x_ref.shape

    def body(i, carry):
        s, diag = carry
        xi = x_ref[i].astype(jnp.float32)               # (C, T) one clip slab
        wi = jnp.sum(xi * xi, axis=0, keepdims=True)    # (1, T) squared norm
        inv = lax.rsqrt(jnp.maximum(wi, EPS * EPS))     # (1, T) EUP slot
        s = s + xi * inv                                 # running sum of unit vecs
        diag = diag + wi * (inv * inv)                   # sum_i ||u_i||^2
        return s, diag

    init = (jnp.zeros((c, t), jnp.float32), jnp.zeros((1, t), jnp.float32))
    s, diag = lax.fori_loop(0, n, body, init, unroll=(n <= 16))

    total = jnp.sum(s * s, axis=0, keepdims=True)        # (1, T) ||sum_i u_i||^2
    res = (total - diag) * (1.0 / float(n * (n - 1)))
    o_ref[...] = res.reshape(1, 1, t)


def variance_map(feature_maps, vmem_budget_bytes=None):
    """feature_maps: (N, B, C, H, W) array (clip-major, NCHW per clip).

    Accepts any float dtype; accumulation is f32 in-kernel. bf16 inputs halve
    HBM traffic and are the recommended ingest format for large features.
    """
    N, B, C, H, W = feature_maps.shape
    assert N >= 2, "VarianceMapModule needs at least 2 clips"
    HW = H * W

    # Contiguous (free) reshape only; keep clip-major layout and input dtype.
    x = feature_maps.reshape(N, B, C, HW)
    itemsize = x.dtype.itemsize

    # Per-chip VMEM capacity (v5e/v6e: 128 MiB, v7x: 64 MiB per TC).
    try:
        info = pltpu.get_tpu_info()
        phys_vmem = int(getattr(info, "vmem_capacity_bytes", 64 << 20))
    except Exception:  # no TPU info available -> conservative default
        phys_vmem = 64 << 20
    if vmem_budget_bytes is None:
        vmem_budget_bytes = max(2 << 20, min(phys_vmem // 2, 32 << 20))

    # Bytes of VMEM needed per output column:
    #   2 input buffers (double-buffering) of N*C*itemsize each, plus the
    #   in-kernel f32 intermediates (~3 * C * 4: xi, s accumulator, temp),
    #   plus small (1, T) vectors / output double-buffer.
    per_col = 2 * N * C * itemsize + 3 * C * 4 + 4 * 4 + 128
    t_max = max(1, vmem_budget_bytes // per_col)

    if t_max >= HW:
        T = HW                                           # full dim: single DMA run, no 128 rule
    else:
        T = min(HW, max(128, (t_max // 128) * 128))      # lane-aligned tiles
    num_tiles = pl.cdiv(HW, T)

    # v7x megacore: with B == 1 make sure there are >= 2 grid slices so both
    # TensorCores get work. Harmless on single-TC v5e/v6e.
    if B == 1 and num_tiles == 1 and HW >= 256:
        half = ((HW + 1) // 2 + 127) // 128 * 128
        if half < HW:
            T = half
            num_tiles = pl.cdiv(HW, T)

    # Scoped-VMEM limit: big enough for the chosen blocks (v5e default is only
    # 16 MiB), but stay inside physical capacity.
    in_block = N * C * T * itemsize
    out_block = T * 4
    est = 2 * (in_block + out_block) + 3 * C * T * 4 + (1 << 20)
    vmem_limit = int(min(max(32 << 20, est), phys_vmem - (2 << 20)))

    out = pl.pallas_call(
        variance_map_kernel,
        out_shape=jax.ShapeDtypeStruct((B, 1, HW), jnp.float32),
        grid=(B, num_tiles),
        in_specs=[
            # Clip-major HBM layout addressed directly; batch dim squeezed.
            pl.BlockSpec((N, None, C, T), lambda b, t: (0, b, 0, t)),
        ],
        out_specs=pl.BlockSpec((1, 1, T), lambda b, t: (b, 0, t)),
        compiler_params=pltpu.CompilerParams(
            dimension_semantics=("parallel", "parallel"),
            vmem_limit_bytes=vmem_limit,
        ),
    )(x)

    return out.reshape(B, H, W).astype(feature_maps.dtype)


def _reference(feature_maps):
    # Pure-JAX replica of the PyTorch double loop, for validation.
    N = feature_maps.shape[0]
    sims = []
    for i in range(N):
        for j in range(N):
            if i != j:
                a = feature_maps[i].astype(jnp.float32)
                b = feature_maps[j].astype(jnp.float32)
                dot = jnp.sum(a * b, axis=1)
                na = jnp.sqrt(jnp.sum(a * a, axis=1))
                nb = jnp.sqrt(jnp.sum(b * b, axis=1))
                sims.append(dot / jnp.maximum(na * nb, EPS))
    return jnp.mean(jnp.stack(sims, axis=0), axis=0)


if __name__ == "__main__":
    num_clips, batch, channels, height, width = 8, 2, 4, 16, 16
    key = jax.random.PRNGKey(0)
    feature_maps = jax.random.normal(
        key, (num_clips, batch, channels, height, width), dtype=jnp.float32
    )

    result = variance_map(feature_maps)
    result = jax.block_until_ready(result)

    expected = _reference(feature_maps)
    assert result.shape == (batch, height, width)
    assert jnp.allclose(result, expected, atol=1e-5, rtol=1e-5)

    print("KERNEL_OK")
</pallas_src>

<mosaic_0001>
module attributes {stable_mosaic.version = 11 : i64} {
  func.func @variance_map_kernel(%arg0: i32, %arg1: i32, %arg2: memref<8x1x4x256xf32, #tpu.memory_space<vmem>>, %arg3: memref<1x1x256xf32, #tpu.memory_space<vmem>>) attributes {dimension_semantics = [#tpu.dimension_semantics<parallel>, #tpu.dimension_semantics<parallel>], iteration_bounds = array<i64: 2, 1>, scalar_prefetch = 0 : i64, scratch_operands = 0 : i64, tpu.core_type = #tpu.core_type<tc>, window_params = [{transform_indices = @transform_0, window_bounds = array<i64: 8, 1, 4, 256>}, {transform_indices = @transform_1, window_bounds = array<i64: 1, 1, 256>}]} {
    %cst = arith.constant 0.000000e+00 : f32
    %0 = vector.broadcast %cst : f32 to vector<4x256xf32>
    %cst_0 = arith.constant 0.000000e+00 : f32
    %1 = vector.broadcast %cst_0 : f32 to vector<1x256xf32>
    %c0_i32 = arith.constant 0 : i32
    %2 = arith.index_cast %c0_i32 : i32 to index
    %c0 = arith.constant 0 : index
    %c0_1 = arith.constant 0 : index
    %c0_2 = arith.constant 0 : index
    %3 = vector.load %arg2[%2, %c0, %c0_1, %c0_2] : memref<8x1x4x256xf32, #tpu.memory_space<vmem>>, vector<1x1x4x256xf32>
    %4 = vector.shape_cast %3 : vector<1x1x4x256xf32> to vector<4x256xf32>
    %5 = arith.mulf %4, %4 : vector<4x256xf32>
    %cst_3 = arith.constant dense<0.000000e+00> : vector<256xf32>
    %6 = vector.multi_reduction <add>, %5, %cst_3 [0] : vector<4x256xf32> to vector<256xf32>
    %7 = vector.shape_cast %6 : vector<256xf32> to vector<1x256xf32>
    %cst_4 = arith.constant 1.000000e-16 : f32
    %8 = vector.broadcast %cst_4 : f32 to vector<1x256xf32>
    %9 = arith.maximumf %7, %8 : vector<1x256xf32>
    %10 = math.rsqrt %9 : vector<1x256xf32>
    %11 = vector.broadcast %10 : vector<1x256xf32> to vector<4x256xf32>
    %12 = arith.mulf %4, %11 : vector<4x256xf32>
    %13 = arith.addf %0, %12 : vector<4x256xf32>
    %14 = arith.mulf %10, %10 : vector<1x256xf32>
    %15 = arith.mulf %7, %14 : vector<1x256xf32>
    %16 = arith.addf %1, %15 : vector<1x256xf32>
    %c1_i32 = arith.constant 1 : i32
    %17 = arith.index_cast %c1_i32 : i32 to index
    %c0_5 = arith.constant 0 : index
    %c0_6 = arith.constant 0 : index
    %c0_7 = arith.constant 0 : index
    %18 = vector.load %arg2[%17, %c0_5, %c0_6, %c0_7] : memref<8x1x4x256xf32, #tpu.memory_space<vmem>>, vector<1x1x4x256xf32>
    %19 = vector.shape_cast %18 : vector<1x1x4x256xf32> to vector<4x256xf32>
    %20 = arith.mulf %19, %19 : vector<4x256xf32>
    %cst_8 = arith.constant dense<0.000000e+00> : vector<256xf32>
    %21 = vector.multi_reduction <add>, %20, %cst_8 [0] : vector<4x256xf32> to vector<256xf32>
    %22 = vector.shape_cast %21 : vector<256xf32> to vector<1x256xf32>
    %cst_9 = arith.constant 1.000000e-16 : f32
    %23 = vector.broadcast %cst_9 : f32 to vector<1x256xf32>
    %24 = arith.maximumf %22, %23 : vector<1x256xf32>
    %25 = math.rsqrt %24 : vector<1x256xf32>
    %26 = vector.broadcast %25 : vector<1x256xf32> to vector<4x256xf32>
    %27 = arith.mulf %19, %26 : vector<4x256xf32>
    %28 = arith.addf %13, %27 : vector<4x256xf32>
    %29 = arith.mulf %25, %25 : vector<1x256xf32>
    %30 = arith.mulf %22, %29 : vector<1x256xf32>
    %31 = arith.addf %16, %30 : vector<1x256xf32>
    %c2_i32 = arith.constant 2 : i32
    %32 = arith.index_cast %c2_i32 : i32 to index
    %c0_10 = arith.constant 0 : index
    %c0_11 = arith.constant 0 : index
    %c0_12 = arith.constant 0 : index
    %33 = vector.load %arg2[%32, %c0_10, %c0_11, %c0_12] : memref<8x1x4x256xf32, #tpu.memory_space<vmem>>, vector<1x1x4x256xf32>
    %34 = vector.shape_cast %33 : vector<1x1x4x256xf32> to vector<4x256xf32>
    %35 = arith.mulf %34, %34 : vector<4x256xf32>
    %cst_13 = arith.constant dense<0.000000e+00> : vector<256xf32>
    %36 = vector.multi_reduction <add>, %35, %cst_13 [0] : vector<4x256xf32> to vector<256xf32>
    %37 = vector.shape_cast %36 : vector<256xf32> to vector<1x256xf32>
    %cst_14 = arith.constant 1.000000e-16 : f32
    %38 = vector.broadcast %cst_14 : f32 to vector<1x256xf32>
    %39 = arith.maximumf %37, %38 : vector<1x256xf32>
    %40 = math.rsqrt %39 : vector<1x256xf32>
    %41 = vector.broadcast %40 : vector<1x256xf32> to vector<4x256xf32>
    %42 = arith.mulf %34, %41 : vector<4x256xf32>
    %43 = arith.addf %28, %42 : vector<4x256xf32>
    %44 = arith.mulf %40, %40 : vector<1x256xf32>
    %45 = arith.mulf %37, %44 : vector<1x256xf32>
    %46 = arith.addf %31, %45 : vector<1x256xf32>
    %c3_i32 = arith.constant 3 : i32
    %47 = arith.index_cast %c3_i32 : i32 to index
    %c0_15 = arith.constant 0 : index
    %c0_16 = arith.constant 0 : index
    %c0_17 = arith.constant 0 : index
    %48 = vector.load %arg2[%47, %c0_15, %c0_16, %c0_17] : memref<8x1x4x256xf32, #tpu.memory_space<vmem>>, vector<1x1x4x256xf32>
    %49 = vector.shape_cast %48 : vector<1x1x4x256xf32> to vector<4x256xf32>
    %50 = arith.mulf %49, %49 : vector<4x256xf32>
    %cst_18 = arith.constant dense<0.000000e+00> : vector<256xf32>
    %51 = vector.multi_reduction <add>, %50, %cst_18 [0] : vector<4x256xf32> to vector<256xf32>
    %52 = vector.shape_cast %51 : vector<256xf32> to vector<1x256xf32>
    %cst_19 = arith.constant 1.000000e-16 : f32
    %53 = vector.broadcast %cst_19 : f32 to vector<1x256xf32>
    %54 = arith.maximumf %52, %53 : vector<1x256xf32>
    %55 = math.rsqrt %54 : vector<1x256xf32>
    %56 = vector.broadcast %55 : vector<1x256xf32> to vector<4x256xf32>
    %57 = arith.mulf %49, %56 : vector<4x256xf32>
    %58 = arith.addf %43, %57 : vector<4x256xf32>
    %59 = arith.mulf %55, %55 : vector<1x256xf32>
    %60 = arith.mulf %52, %59 : vector<1x256xf32>
    %61 = arith.addf %46, %60 : vector<1x256xf32>
    %c4_i32 = arith.constant 4 : i32
    %62 = arith.index_cast %c4_i32 : i32 to index
    %c0_20 = arith.constant 0 : index
    %c0_21 = arith.constant 0 : index
    %c0_22 = arith.constant 0 : index
    %63 = vector.load %arg2[%62, %c0_20, %c0_21, %c0_22] : memref<8x1x4x256xf32, #tpu.memory_space<vmem>>, vector<1x1x4x256xf32>
    %64 = vector.shape_cast %63 : vector<1x1x4x256xf32> to vector<4x256xf32>
    %65 = arith.mulf %64, %64 : vector<4x256xf32>
    %cst_23 = arith.constant dense<0.000000e+00> : vector<256xf32>
    %66 = vector.multi_reduction <add>, %65, %cst_23 [0] : vector<4x256xf32> to vector<256xf32>
    %67 = vector.shape_cast %66 : vector<256xf32> to vector<1x256xf32>
    %cst_24 = arith.constant 1.000000e-16 : f32
    %68 = vector.broadcast %cst_24 : f32 to vector<1x256xf32>
    %69 = arith.maximumf %67, %68 : vector<1x256xf32>
    %70 = math.rsqrt %69 : vector<1x256xf32>
    %71 = vector.broadcast %70 : vector<1x256xf32> to vector<4x256xf32>
    %72 = arith.mulf %64, %71 : vector<4x256xf32>
    %73 = arith.addf %58, %72 : vector<4x256xf32>
    %74 = arith.mulf %70, %70 : vector<1x256xf32>
    %75 = arith.mulf %67, %74 : vector<1x256xf32>
    %76 = arith.addf %61, %75 : vector<1x256xf32>
    %c5_i32 = arith.constant 5 : i32
    %77 = arith.index_cast %c5_i32 : i32 to index
    %c0_25 = arith.constant 0 : index
    %c0_26 = arith.constant 0 : index
    %c0_27 = arith.constant 0 : index
    %78 = vector.load %arg2[%77, %c0_25, %c0_26, %c0_27] : memref<8x1x4x256xf32, #tpu.memory_space<vmem>>, vector<1x1x4x256xf32>
    %79 = vector.shape_cast %78 : vector<1x1x4x256xf32> to vector<4x256xf32>
    %80 = arith.mulf %79, %79 : vector<4x256xf32>
    %cst_28 = arith.constant dense<0.000000e+00> : vector<256xf32>
    %81 = vector.multi_reduction <add>, %80, %cst_28 [0] : vector<4x256xf32> to vector<256xf32>
    %82 = vector.shape_cast %81 : vector<256xf32> to vector<1x256xf32>
    %cst_29 = arith.constant 1.000000e-16 : f32
    %83 = vector.broadcast %cst_29 : f32 to vector<1x256xf32>
    %84 = arith.maximumf %82, %83 : vector<1x256xf32>
    %85 = math.rsqrt %84 : vector<1x256xf32>
    %86 = vector.broadcast %85 : vector<1x256xf32> to vector<4x256xf32>
    %87 = arith.mulf %79, %86 : vector<4x256xf32>
    %88 = arith.addf %73, %87 : vector<4x256xf32>
    %89 = arith.mulf %85, %85 : vector<1x256xf32>
    %90 = arith.mulf %82, %89 : vector<1x256xf32>
    %91 = arith.addf %76, %90 : vector<1x256xf32>
    %c6_i32 = arith.constant 6 : i32
    %92 = arith.index_cast %c6_i32 : i32 to index
    %c0_30 = arith.constant 0 : index
    %c0_31 = arith.constant 0 : index
    %c0_32 = arith.constant 0 : index
    %93 = vector.load %arg2[%92, %c0_30, %c0_31, %c0_32] : memref<8x1x4x256xf32, #tpu.memory_space<vmem>>, vector<1x1x4x256xf32>
    %94 = vector.shape_cast %93 : vector<1x1x4x256xf32> to vector<4x256xf32>
    %95 = arith.mulf %94, %94 : vector<4x256xf32>
    %cst_33 = arith.constant dense<0.000000e+00> : vector<256xf32>
    %96 = vector.multi_reduction <add>, %95, %cst_33 [0] : vector<4x256xf32> to vector<256xf32>
    %97 = vector.shape_cast %96 : vector<256xf32> to vector<1x256xf32>
    %cst_34 = arith.constant 1.000000e-16 : f32
    %98 = vector.broadcast %cst_34 : f32 to vector<1x256xf32>
    %99 = arith.maximumf %97, %98 : vector<1x256xf32>
    %100 = math.rsqrt %99 : vector<1x256xf32>
    %101 = vector.broadcast %100 : vector<1x256xf32> to vector<4x256xf32>
    %102 = arith.mulf %94, %101 : vector<4x256xf32>
    %103 = arith.addf %88, %102 : vector<4x256xf32>
    %104 = arith.mulf %100, %100 : vector<1x256xf32>
    %105 = arith.mulf %97, %104 : vector<1x256xf32>
    %106 = arith.addf %91, %105 : vector<1x256xf32>
    %c7_i32 = arith.constant 7 : i32
    %107 = arith.index_cast %c7_i32 : i32 to index
    %c0_35 = arith.constant 0 : index
    %c0_36 = arith.constant 0 : index
    %c0_37 = arith.constant 0 : index
    %108 = vector.load %arg2[%107, %c0_35, %c0_36, %c0_37] : memref<8x1x4x256xf32, #tpu.memory_space<vmem>>, vector<1x1x4x256xf32>
    %109 = vector.shape_cast %108 : vector<1x1x4x256xf32> to vector<4x256xf32>
    %110 = arith.mulf %109, %109 : vector<4x256xf32>
    %cst_38 = arith.constant dense<0.000000e+00> : vector<256xf32>
    %111 = vector.multi_reduction <add>, %110, %cst_38 [0] : vector<4x256xf32> to vector<256xf32>
    %112 = vector.shape_cast %111 : vector<256xf32> to vector<1x256xf32>
    %cst_39 = arith.constant 1.000000e-16 : f32
    %113 = vector.broadcast %cst_39 : f32 to vector<1x256xf32>
    %114 = arith.maximumf %112, %113 : vector<1x256xf32>
    %115 = math.rsqrt %114 : vector<1x256xf32>
    %116 = vector.broadcast %115 : vector<1x256xf32> to vector<4x256xf32>
    %117 = arith.mulf %109, %116 : vector<4x256xf32>
    %118 = arith.addf %103, %117 : vector<4x256xf32>
    %119 = arith.mulf %115, %115 : vector<1x256xf32>
    %120 = arith.mulf %112, %119 : vector<1x256xf32>
    %121 = arith.addf %106, %120 : vector<1x256xf32>
    %c8_i32 = arith.constant 8 : i32
    %122 = arith.mulf %118, %118 : vector<4x256xf32>
    %cst_40 = arith.constant dense<0.000000e+00> : vector<256xf32>
    %123 = vector.multi_reduction <add>, %122, %cst_40 [0] : vector<4x256xf32> to vector<256xf32>
    %124 = vector.shape_cast %123 : vector<256xf32> to vector<1x256xf32>
    %125 = arith.subf %124, %121 : vector<1x256xf32>
    %cst_41 = arith.constant 0.0178571437 : f32
    %126 = vector.broadcast %cst_41 : f32 to vector<1x256xf32>
    %127 = arith.mulf %125, %126 : vector<1x256xf32>
    %128 = vector.shape_cast %127 : vector<1x256xf32> to vector<1x1x256xf32>
    %c0_42 = arith.constant 0 : index
    %c0_43 = arith.constant 0 : index
    %c0_44 = arith.constant 0 : index
    %129 = vector.load %arg3[%c0_42, %c0_43, %c0_44] : memref<1x1x256xf32, #tpu.memory_space<vmem>>, vector<1x1x256xf32>
    tpu.vector_store %arg3[%c0_42, %c0_43, %c0_44], %128 {strides = array<i32>} : memref<1x1x256xf32, #tpu.memory_space<vmem>>, vector<1x1x256xf32>,
    return
  }
  func.func @transform_0(%arg0: i32, %arg1: i32) -> (i32, i32, i32, i32) {
    %c0_i32 = arith.constant 0 : i32
    %c0_i32_0 = arith.constant 0 : i32
    %c0_i32_1 = arith.constant 0 : i32
    return %c0_i32, %arg0, %c0_i32_0, %arg1 : i32, i32, i32, i32
  }
  func.func @transform_1(%arg0: i32, %arg1: i32) -> (i32, i32, i32) {
    %c0_i32 = arith.constant 0 : i32
    %c0_i32_0 = arith.constant 0 : i32
    return %arg0, %c0_i32, %arg1 : i32, i32, i32
  }
}

</mosaic_0001>

<llo_original>
// kernel: tpu_custom_call.1
$region0: #{tpu_custom_call.1}
  #allocation0 [shape = 'u32[]', space=smem, size = 0x4, offset = 0x4, fixed_abs, tag = 'smem constant byte address 0x4 - core index']
  #allocation1 [shape = 'u32[144,128]{1,0:T(1,128)}', space=vmem, size = 0x12000, scoped, tag = 'internal scratch']
  %s0 = inlined_call_operand.hbm [shape: f32[8,2,4,256], index: 0, kind: input, shape index: {}]
  %s1 = inlined_call_operand.hbm [shape: f32[2,1,256], index: 1, kind: output, shape index: {}]
  %s2 = sld [smem:[#allocation0]]
  $region41: #{tpu_custom_call.1} parent=0
    _
  %s4 = ssub.s32 1, %s2
  %s5 = scalar_select 0, %s4, %s2
  $region1: #{tpu_custom_call.1} parent=0
    #allocation2 [shape = 'u8[65536]{0}', space=vmem, size = 0x10000, scoped, tag = 'input window, operand 0']
    #allocation3 [shape = 's32[2]{0}', space=sflag, size = 0x8, scoped, tag = 'scoped memory for tpu_custom_call.1']
    #allocation4 [shape = 's32[2]{0}', space=sflag, size = 0x8, scoped, tag = 'scoped memory for tpu_custom_call.1']
    #allocation5 [shape = 'u8[2048]{0}', space=vmem, size = 0x800, scoped, tag = 'output window, operand 0']
    %6 = vsyncpa [#allocation3], 0
    %s7 = scalar_lea.sflag [#allocation3], 1
    %8 = vsyncpa %s7, 0
    %9 = vsyncpa [#allocation4], 0
    %s10 = scalar_lea.sflag [#allocation4], 1
    %11 = vsyncpa %s10, 0
    loop: start=0, step=1, limit=4
    $region2: #{tpu_custom_call.1} parent=1 // loop_pre_header
      _
    $region3: #{tpu_custom_call.1} parent=1 // loop_header
      %s13 = sphi 0, %s17
      %p14 = scmp.ge.s32.totalorder %s13, 4
      %s20 = sphi 0, %s32
      %s21 = sphi 0, %s28
      %s22 = sphi 0, %s20
      %s23 = sphi 0, %s21
      %s24 = sphi 0, %s22
      %s25 = sphi 0, %s23
      %s37 = sphi 0, %s39
      %s40 = sphi 0, %s37
      %s41 = sphi 0, %s40
      %s57 = sphi 0, %s41
      %s65 = sphi 0, %s67
      %s68 = sphi 0, %s65
      %s69 = sphi 0, %s68
      %s85 = sphi 0, %s69
    $region4: #{tpu_custom_call.1} parent=1 // loop_header_branch
      %16 = sbr.rel (%p14) target = $region8
    $region5: #{tpu_custom_call.1} parent=1 // loop_body
      %s18 = ssub.s32 %s13, 1
      %s19 = ssub.s32 %s13, 2
      %s26 = sadd.s32 1, %s21
      %p27 = scmp.ge.s32.totalorder %s26, 1
      %s28 = scalar_select %p27, 0, %s26
      %s29 = sadd.s32 1, %s20
      %s30 = scalar_select %p27, %s29, %s20
      %p31 = scmp.ge.s32.totalorder %s30, 2
      %s32 = scalar_select %p31, 0, %s30
      %s33 = ssub.s32 %s20, %s32
      %s34 = ssub.s32 %s21, %s28
      %s35 = sor.u32 %s33, %s34
      %p36 = scmp.eq.s32.totalorder %s35, 0
      %s38 = sadd.s32 %s37, 1
      %s39 = scalar_select %p36, %s37, %s38
      %p42 = pneg %p36
      %p43 = scmp.eq.s32.totalorder %s13, 1
      %p44 = por %p42, %p43
      %p45 = scmp.ne.s32.totalorder %s37, %s40
      %p46 = scmp.eq.s32.totalorder %s13, 0
      %p47 = por %p45, %p46
      %p48 = scmp.ne.s32.totalorder %s37, %s40
      %p49 = scmp.eq.s32.totalorder %s18, 1
      %p50 = por %p48, %p49
      %p51 = scmp.ne.s32.totalorder %s40, %s41
      %p52 = scmp.eq.s32.totalorder %s18, 0
      %p53 = por %p51, %p52
      %p54 = scmp.ne.s32.totalorder %s40, %s41
      %p55 = scmp.eq.s32.totalorder %s19, 1
      %p56 = por %p54, %p55
      %p58 = scmp.ne.s32.totalorder %s41, %s57
      %p59 = scmp.eq.s32.totalorder %s19, 0
      %p60 = por %p58, %p59
      %s61 = ssub.s32 %s20, %s32
      %s62 = ssub.s32 %s21, %s28
      %s63 = sor.u32 %s61, %s62
      %p64 = scmp.eq.s32.totalorder %s63, 0
      %s66 = sadd.s32 %s65, 1
      %s67 = scalar_select %p64, %s65, %s66
      %p70 = pneg %p64
      %p71 = scmp.eq.s32.totalorder %s13, 1
      %p72 = por %p70, %p71
      %p73 = scmp.ne.s32.totalorder %s65, %s68
      %p74 = scmp.eq.s32.totalorder %s13, 0
      %p75 = por %p73, %p74
      %p76 = scmp.ne.s32.totalorder %s65, %s68
      %p77 = scmp.eq.s32.totalorder %s18, 1
      %p78 = por %p76, %p77
      %p79 = scmp.ne.s32.totalorder %s68, %s69
      %p80 = scmp.eq.s32.totalorder %s18, 0
      %p81 = por %p79, %p80
      %p82 = scmp.ne.s32.totalorder %s68, %s69
      %p83 = scmp.eq.s32.totalorder %s19, 1
      %p84 = por %p82, %p83
      %p86 = scmp.ne.s32.totalorder %s69, %s85
      %p87 = scmp.eq.s32.totalorder %s19, 0
      %p88 = por %p86, %p87
      %p89 = scmp.le.s32.totalorder 1, %s13
      %p90 = scmp.lt.s32.totalorder %s13, 3
      %p91 = pnand %p89, %p90
      %p92 = pneg %p91
      // Predicated region
      $region9: #{tpu_custom_call.1} parent=5 // pred_check
        _
      $region10: #{tpu_custom_call.1} parent=5 // pred_check_branch
        %94 = sbr.rel (%p91) target = $region12
      $region11: #{tpu_custom_call.1} parent=5 // pred_region
        %s95 = ssub.s32 %s13, 1
      $region12: #{tpu_custom_call.1} parent=5 // pred_fallthru
        _
      %p96 = scmp.lt.s32.totalorder %s13, 2
      // Predicated region
      $region13: #{tpu_custom_call.1} parent=5 // pred_check
        %p97 = pneg %p96
      $region14: #{tpu_custom_call.1} parent=5 // pred_check_branch
        %99 = sbr.rel (%p97) target = $region16
      $region15: #{tpu_custom_call.1} parent=5 // pred_region
        // Predicated region
        $region17: #{tpu_custom_call.1} parent=15 // pred_check
          %p100 = pneg %p47
        $region18: #{tpu_custom_call.1} parent=15 // pred_check_branch
          %102 = sbr.rel (%p100) target = $region20
        $region19: #{tpu_custom_call.1} parent=15 // pred_region
          %s103 = sand.u32 %s37, 1
          %s104 = scalar_lea.sflag [#allocation3], %s103
          %s105 = sand.u32 %s37, 1
          %s106 = smul.addr %s105, 64
          %s107 = scalar_lea.vmem [#allocation2], %s106
          %s108 = smul.u32 2, %s21
          %s110 = ssub.s32 1024, 1024
          %111 = vsyncadd %s104, %s110
          %s112 = smul.addr %s20, 2
          %s113 = sadd.s32 %s108, %s112
          %s114 = smul.addr %s113, 64
          %s115 = scalar_lea.hbm %s0, %s114
          %s116 = sshll.u32 %s107, 4
          %s117 = int_to_ptr.vmem [resolvable:$true] %s116
          %122 = dma.hbm_to_vmem [thread:$0]  %s115, 1024, %s117, %s104, 256, 128, 8
        $region20: #{tpu_custom_call.1} parent=15 // pred_fallthru
          _
      $region16: #{tpu_custom_call.1} parent=5 // pred_fallthru
        _
      %p123 = scmp.le.s32.totalorder 1, %s13
      %p124 = scmp.lt.s32.totalorder %s13, 3
      %p125 = pnand %p123, %p124
      %p126 = pneg %p125
      // Predicated region
      $region21: #{tpu_custom_call.1} parent=5 // pred_check
        _
      $region22: #{tpu_custom_call.1} parent=5 // pred_check_branch
        %128 = sbr.rel (%p125) target = $region24
      $region23: #{tpu_custom_call.1} parent=5 // pred_region
        %s129 = ssub.s32 %s13, 1
        %s130 = sand.u32 %s40, 1
        %s131 = scalar_lea.sflag [#allocation3], %s130
        %s132 = sand.u32 %s40, 1
        %s133 = smul.addr %s132, 64
        %s134 = scalar_lea.vmem [#allocation2], %s133
        // Predicated region
        $region25: #{tpu_custom_call.1} parent=23 // pred_check
          %p135 = pneg %p53
        $region26: #{tpu_custom_call.1} parent=23 // pred_check_branch
          %137 = sbr.rel (%p135) target = $region28
        $region27: #{tpu_custom_call.1} parent=23 // pred_region
          %138 = dma.done %s131, 1024
        $region28: #{tpu_custom_call.1} parent=23 // pred_fallthru
          _
        %s139 = sand.u32 %s40, 1
        %s140 = scalar_lea.sflag [#allocation3], %s139
        %s141 = sand.u32 %s40, 1
        %s142 = smul.addr %s141, 64
        %s143 = scalar_lea.vmem [#allocation2], %s142
        %p144 = pneg %p53
        %p145 = pneg %p50
        %p146 = pneg %p81
        %p147 = pneg %p78
        %s148 = sand.u32 %s68, 1
        %s149 = scalar_lea.sflag [#allocation4], %s148
        %s150 = sand.u32 %s68, 1
        %s151 = smul.addr %s150, 2
        %s152 = scalar_lea.vmem [#allocation5], %s151
        %s153 = smul.u32 2, %s23
        %s154 = smul.u32 2, %s23
        %v155 = vld [vmem:[%s134] sm:$0xff]
        %v156 = vmul.f32 %v155, %v155
        %v158 = vcombine.high %v156, %v156
        %vm160 = vcmask 1043456
        %v161 = vsel %vm160, %v156, 0.0
        %v162 = vrot.slane %v161, 4
        %v163 = vadd.f32 %v161, %v162
        %v164 = vrot.slane %v163, 2
        %v165 = vadd.f32 %v163, %v164
        %v166 = vrot.slane %v165, 1
        %v167 = vadd.f32 %v165, %v166
        %v168 = vsel %vm160, %v158, 0.0
        %v169 = vrot.slane %v168, 4
        %v170 = vadd.f32 %v168, %v169
        %v171 = vrot.slane %v170, 2
        %v172 = vadd.f32 %v170, %v171
        %v173 = vrot.slane %v172, 1
        %v174 = vadd.f32 %v172, %v173
        %v175 = vmax.f32 %v167, 1e-16
        %v176 = vmax.f32 %v174, 1e-16
        %v177 = vrsqrt.pop %v175
        %v178 = vrsqrt.pop %v176
        %v181 = vcombine.low %v177, %v178
        %v183 = vmul.f32 %v155, %v181
        %v184 = vadd.f32 %v183, 0.0
        %v185 = vmul.f32 %v177, %v177
        %v186 = vmul.f32 %v178, %v178
        %v187 = vmul.f32 %v167, %v185
        %v188 = vmul.f32 %v174, %v186
        %v189 = vadd.f32 %v187, 0.0
        %v190 = vadd.f32 %v188, 0.0
        %s191 = scalar_lea.vmem %s134, 8 [#allocation2]
        %v192 = vld [vmem:[%s191] sm:$0xff]
        %v193 = vmul.f32 %v192, %v192
        %v195 = vcombine.high %v193, %v193
        %v197 = vsel %vm160, %v193, 0.0
        %v198 = vrot.slane %v197, 4
        %v199 = vadd.f32 %v197, %v198
        %v200 = vrot.slane %v199, 2
        %v201 = vadd.f32 %v199, %v200
        %v202 = vrot.slane %v201, 1
        %v203 = vadd.f32 %v201, %v202
        %v204 = vsel %vm160, %v195, 0.0
        %v205 = vrot.slane %v204, 4
        %v206 = vadd.f32 %v204, %v205
        %v207 = vrot.slane %v206, 2
        %v208 = vadd.f32 %v206, %v207
        %v209 = vrot.slane %v208, 1
        %v210 = vadd.f32 %v208, %v209
        %v211 = vmax.f32 %v203, 1e-16
        %v212 = vmax.f32 %v210, 1e-16
        %v213 = vrsqrt.pop %v211
        %v214 = vrsqrt.pop %v212
        %v217 = vcombine.low %v213, %v214
        %v219 = vmul.f32 %v192, %v217
        %v220 = vadd.f32 %v184, %v219
        %v221 = vmul.f32 %v213, %v213
        %v222 = vmul.f32 %v214, %v214
        %v223 = vmul.f32 %v203, %v221
        %v224 = vmul.f32 %v210, %v222
        %v225 = vadd.f32 %v189, %v223
        %v226 = vadd.f32 %v190, %v224
        %s227 = scalar_lea.vmem %s134, 16 [#allocation2]
        %v228 = vld [vmem:[%s227] sm:$0xff]
        %v229 = vmul.f32 %v228, %v228
        %v231 = vcombine.high %v229, %v229
        %v233 = vsel %vm160, %v229, 0.0
        %v234 = vrot.slane %v233, 4
        %v235 = vadd.f32 %v233, %v234
        %v236 = vrot.slane %v235, 2
        %v237 = vadd.f32 %v235, %v236
        %v238 = vrot.slane %v237, 1
        %v239 = vadd.f32 %v237, %v238
        %v240 = vsel %vm160, %v231, 0.0
        %v241 = vrot.slane %v240, 4
        %v242 = vadd.f32 %v240, %v241
        %v243 = vrot.slane %v242, 2
        %v244 = vadd.f32 %v242, %v243
        %v245 = vrot.slane %v244, 1
        %v246 = vadd.f32 %v244, %v245
        %v247 = vmax.f32 %v239, 1e-16
        %v248 = vmax.f32 %v246, 1e-16
        %v249 = vrsqrt.pop %v247
        %v250 = vrsqrt.pop %v248
        %v253 = vcombine.low %v249, %v250
        %v255 = vmul.f32 %v228, %v253
        %v256 = vadd.f32 %v220, %v255
        %v257 = vmul.f32 %v249, %v249
        %v258 = vmul.f32 %v250, %v250
        %v259 = vmul.f32 %v239, %v257
        %v260 = vmul.f32 %v246, %v258
        %v261 = vadd.f32 %v225, %v259
        %v262 = vadd.f32 %v226, %v260
        %s263 = scalar_lea.vmem %s134, 24 [#allocation2]
        %v264 = vld [vmem:[%s263] sm:$0xff]
        %v265 = vmul.f32 %v264, %v264
        %v267 = vcombine.high %v265, %v265
        %v269 = vsel %vm160, %v265, 0.0
        %v270 = vrot.slane %v269, 4
        %v271 = vadd.f32 %v269, %v270
        %v272 = vrot.slane %v271, 2
        %v273 = vadd.f32 %v271, %v272
        %v274 = vrot.slane %v273, 1
        %v275 = vadd.f32 %v273, %v274
        %v276 = vsel %vm160, %v267, 0.0
        %v277 = vrot.slane %v276, 4
        %v278 = vadd.f32 %v276, %v277
        %v279 = vrot.slane %v278, 2
        %v280 = vadd.f32 %v278, %v279
        %v281 = vrot.slane %v280, 1
        %v282 = vadd.f32 %v280, %v281
        %v283 = vmax.f32 %v275, 1e-16
        %v284 = vmax.f32 %v282, 1e-16
        %v285 = vrsqrt.pop %v283
        %v286 = vrsqrt.pop %v284
        %v289 = vcombine.low %v285, %v286
        %v291 = vmul.f32 %v264, %v289
        %v292 = vadd.f32 %v256, %v291
        %v293 = vmul.f32 %v285, %v285
        %v294 = vmul.f32 %v286, %v286
        %v295 = vmul.f32 %v275, %v293
        %v296 = vmul.f32 %v282, %v294
        %v297 = vadd.f32 %v261, %v295
        %v298 = vadd.f32 %v262, %v296
        %s299 = scalar_lea.vmem %s134, 32 [#allocation2]
        %v300 = vld [vmem:[%s299] sm:$0xff]
        %v301 = vmul.f32 %v300, %v300
        %v303 = vcombine.high %v301, %v301
        %v305 = vsel %vm160, %v301, 0.0
        %v306 = vrot.slane %v305, 4
        %v307 = vadd.f32 %v305, %v306
        %v308 = vrot.slane %v307, 2
        %v309 = vadd.f32 %v307, %v308
        %v310 = vrot.slane %v309, 1
        %v311 = vadd.f32 %v309, %v310
        %v312 = vsel %vm160, %v303, 0.0
        %v313 = vrot.slane %v312, 4
        %v314 = vadd.f32 %v312, %v313
        %v315 = vrot.slane %v314, 2
        %v316 = vadd.f32 %v314, %v315
        %v317 = vrot.slane %v316, 1
        %v318 = vadd.f32 %v316, %v317
        %v319 = vmax.f32 %v311, 1e-16
        %v320 = vmax.f32 %v318, 1e-16
        %v321 = vrsqrt.pop %v319
        %v322 = vrsqrt.pop %v320
        %v325 = vcombine.low %v321, %v322
        %v327 = vmul.f32 %v300, %v325
        %v328 = vadd.f32 %v292, %v327
        %v329 = vmul.f32 %v321, %v321
        %v330 = vmul.f32 %v322, %v322
        %v331 = vmul.f32 %v311, %v329
        %v332 = vmul.f32 %v318, %v330
        %v333 = vadd.f32 %v297, %v331
        %v334 = vadd.f32 %v298, %v332
        %s335 = scalar_lea.vmem %s134, 40 [#allocation2]
        %v336 = vld [vmem:[%s335] sm:$0xff]
        %v337 = vmul.f32 %v336, %v336
        %v339 = vcombine.high %v337, %v337
        %v341 = vsel %vm160, %v337, 0.0
        %v342 = vrot.slane %v341, 4
        %v343 = vadd.f32 %v341, %v342
        %v344 = vrot.slane %v343, 2
        %v345 = vadd.f32 %v343, %v344
        %v346 = vrot.slane %v345, 1
        %v347 = vadd.f32 %v345, %v346
        %v348 = vsel %vm160, %v339, 0.0
        %v349 = vrot.slane %v348, 4
        %v350 = vadd.f32 %v348, %v349
        %v351 = vrot.slane %v350, 2
        %v352 = vadd.f32 %v350, %v351
        %v353 = vrot.slane %v352, 1
        %v354 = vadd.f32 %v352, %v353
        %v355 = vmax.f32 %v347, 1e-16
        %v356 = vmax.f32 %v354, 1e-16
        %v357 = vrsqrt.pop %v355
        %v358 = vrsqrt.pop %v356
        %v361 = vcombine.low %v357, %v358
        %v363 = vmul.f32 %v336, %v361
        %v364 = vadd.f32 %v328, %v363
        %v365 = vmul.f32 %v357, %v357
        %v366 = vmul.f32 %v358, %v358
        %v367 = vmul.f32 %v347, %v365
        %v368 = vmul.f32 %v354, %v366
        %v369 = vadd.f32 %v333, %v367
        %v370 = vadd.f32 %v334, %v368
        %s371 = scalar_lea.vmem %s134, 48 [#allocation2]
        %v372 = vld [vmem:[%s371] sm:$0xff]
        %v373 = vmul.f32 %v372, %v372
        %v375 = vcombine.high %v373, %v373
        %v377 = vsel %vm160, %v373, 0.0
        %v378 = vrot.slane %v377, 4
        %v379 = vadd.f32 %v377, %v378
        %v380 = vrot.slane %v379, 2
        %v381 = vadd.f32 %v379, %v380
        %v382 = vrot.slane %v381, 1
        %v383 = vadd.f32 %v381, %v382
        %v384 = vsel %vm160, %v375, 0.0
        %v385 = vrot.slane %v384, 4
        %v386 = vadd.f32 %v384, %v385
        %v387 = vrot.slane %v386, 2
        %v388 = vadd.f32 %v386, %v387
        %v389 = vrot.slane %v388, 1
        %v390 = vadd.f32 %v388, %v389
        %v391 = vmax.f32 %v383, 1e-16
        %v392 = vmax.f32 %v390, 1e-16
        %v393 = vrsqrt.pop %v391
        %v394 = vrsqrt.pop %v392
        %v397 = vcombine.low %v393, %v394
        %v399 = vmul.f32 %v372, %v397
        %v400 = vadd.f32 %v364, %v399
        %v401 = vmul.f32 %v393, %v393
        %v402 = vmul.f32 %v394, %v394
        %v403 = vmul.f32 %v383, %v401
        %v404 = vmul.f32 %v390, %v402
        %v405 = vadd.f32 %v369, %v403
        %v406 = vadd.f32 %v370, %v404
        %s407 = scalar_lea.vmem %s134, 56 [#allocation2]
        %v408 = vld [vmem:[%s407] sm:$0xff]
        %v409 = vmul.f32 %v408, %v408
        %v411 = vcombine.high %v409, %v409
        %v413 = vsel %vm160, %v409, 0.0
        %v414 = vrot.slane %v413, 4
        %v415 = vadd.f32 %v413, %v414
        %v416 = vrot.slane %v415, 2
        %v417 = vadd.f32 %v415, %v416
        %v418 = vrot.slane %v417, 1
        %v419 = vadd.f32 %v417, %v418
        %v420 = vsel %vm160, %v411, 0.0
        %v421 = vrot.slane %v420, 4
        %v422 = vadd.f32 %v420, %v421
        %v423 = vrot.slane %v422, 2
        %v424 = vadd.f32 %v422, %v423
        %v425 = vrot.slane %v424, 1
        %v426 = vadd.f32 %v424, %v425
        %v427 = vmax.f32 %v419, 1e-16
        %v428 = vmax.f32 %v426, 1e-16
        %v429 = vrsqrt.pop %v427
        %v430 = vrsqrt.pop %v428
        %v433 = vcombine.low %v429, %v430
        %v435 = vmul.f32 %v408, %v433
        %v436 = vadd.f32 %v400, %v435
        %v437 = vmul.f32 %v429, %v429
        %v438 = vmul.f32 %v430, %v430
        %v439 = vmul.f32 %v419, %v437
        %v440 = vmul.f32 %v426, %v438
        %v441 = vadd.f32 %v405, %v439
        %v442 = vadd.f32 %v406, %v440
        %v443 = vmul.f32 %v436, %v436
        %v445 = vcombine.high %v443, %v443
        %v447 = vsel %vm160, %v443, 0.0
        %v448 = vrot.slane %v447, 4
        %v449 = vadd.f32 %v447, %v448
        %v450 = vrot.slane %v449, 2
        %v451 = vadd.f32 %v449, %v450
        %v452 = vrot.slane %v451, 1
        %v453 = vadd.f32 %v451, %v452
        %v454 = vsel %vm160, %v445, 0.0
        %v455 = vrot.slane %v454, 4
        %v456 = vadd.f32 %v454, %v455
        %v457 = vrot.slane %v456, 2
        %v458 = vadd.f32 %v456, %v457
        %v459 = vrot.slane %v458, 1
        %v460 = vadd.f32 %v458, %v459
        %v461 = vsub.f32 %v453, %v441
        %v462 = vsub.f32 %v460, %v442
        %v463 = vmul.f32 %v461, 0.017857144
        %v464 = vmul.f32 %v462, 0.017857144
        %v467 = vcombine.low %v463, %v464
        %v469 = vunpack.c.l.s4 1966171168
        %v470 = vunpack.c.0.s8 %v469
        %v471 = vlaneseq
        %v472 = vshrl.u32 %v471, 7
        %v473 = vsub.s32 %v470, %v472
        %v474 = vrot.slane %v467, %v473
        %v476 = vunpack.c.l.s4 1966171168
        %v477 = vunpack.c.0.s8 %v476
        %v478 = vlaneseq
        %v479 = vshrl.u32 %v478, 7
        %v480 = vsub.s32 %v477, %v479
        %v481 = vrot.slane %v474, %v480
        %v483 = vlaneseq
        %vm484 = vcmp.ge.s32.totalorder %v483, 0
        %vm485 = vcmp.lt.s32.totalorder %v483, 256
        %vm486 = vmand %vm484, %vm485
        %487 = vst.msk [vmem:[%s152] sm:$0x3] %vm486, %v481
        %s488 = sand.u32 %s68, 1
        %s489 = scalar_lea.sflag [#allocation4], %s488
        %s490 = sand.u32 %s68, 1
        %s491 = smul.addr %s490, 2
        %s492 = scalar_lea.vmem [#allocation5], %s491
        // Predicated region
        $region29: #{tpu_custom_call.1} parent=23 // pred_check
          %p493 = pneg %p78
        $region30: #{tpu_custom_call.1} parent=23 // pred_check_branch
          %495 = sbr.rel (%p493) target = $region32
        $region31: #{tpu_custom_call.1} parent=23 // pred_region
          %s496 = smul.u32 2, %s23
          %s498 = ssub.s32 32, 32
          %499 = vsyncadd %s489, %s498
          %s500 = smul.addr %s22, 2
          %s501 = sadd.s32 %s496, %s500
          %s502 = smul.addr %s501, 16
          %s503 = scalar_lea.hbm %s1, %s502
          %s505 = sshll.u32 %s492, 4
          %s506 = int_to_ptr.vmem [resolvable:$true] %s505
          %508 = dma.vmem_to_hbm [thread:$0]  %s506, 32, %s503, %s489
        $region32: #{tpu_custom_call.1} parent=23 // pred_fallthru
          _
      $region24: #{tpu_custom_call.1} parent=5 // pred_fallthru
        _
      %p509 = scmp.le.s32.totalorder 2, %s13
      // Predicated region
      $region33: #{tpu_custom_call.1} parent=5 // pred_check
        %p510 = pneg %p509
      $region34: #{tpu_custom_call.1} parent=5 // pred_check_branch
        %512 = sbr.rel (%p510) target = $region36
      $region35: #{tpu_custom_call.1} parent=5 // pred_region
        %s513 = ssub.s32 %s13, 2
        // Predicated region
        $region37: #{tpu_custom_call.1} parent=35 // pred_check
          %p514 = pneg %p84
        $region38: #{tpu_custom_call.1} parent=35 // pred_check_branch
          %516 = sbr.rel (%p514) target = $region40
        $region39: #{tpu_custom_call.1} parent=35 // pred_region
          %s517 = sand.u32 %s69, 1
          %s518 = scalar_lea.sflag [#allocation4], %s517
          %s519 = sand.u32 %s69, 1
          %s520 = smul.addr %s519, 2
          %s521 = scalar_lea.vmem [#allocation5], %s520
          %522 = dma.done %s518, 32
        $region40: #{tpu_custom_call.1} parent=35 // pred_fallthru
          _
      $region36: #{tpu_custom_call.1} parent=5 // pred_fallthru
        _
    $region6: #{tpu_custom_call.1} parent=1 // loop_footer
      %s17 = sadd.s32 1, %s13
    $region7: #{tpu_custom_call.1} parent=1 // loop_footer_branch
      %12 = sbr.rel target = $region3
    $region8: #{tpu_custom_call.1} parent=1 // loop_exit
      _
    %523 = vsyncpa [#allocation3], 1
    %s524 = scalar_lea.sflag [#allocation3], 1
    %525 = vsyncpa %s524, 1
    %526 = vsyncpa [#allocation4], 1
    %s527 = scalar_lea.sflag [#allocation4], 1
    %528 = vsyncpa %s527, 1

</llo_original>
